<compile_context>
chip_gen: v7x
topology: tpu7x:2x2x1
jax: 0.10.0
libtpu: 0.0.40
codegen_flags: <defaults>
</compile_context>

<pallas_src>
import jax
import jax.numpy as jnp
from jax.experimental import pallas as pl
from jax.experimental.pallas import tpu as pltpu

LN_EPS = 1e-5  # PyTorch nn.LayerNorm default


def _round_up(n, m):
    return ((n + m - 1) // m) * m


def ffn_kernel(x_ref, w1_ref, b1_ref, w2_ref, b2_ref, g_ref, beta_ref, o_ref, acc_ref):
    # Grid: (row tiles, H chunks). H-chunk axis is the reduction axis.
    k = pl.program_id(1)

    @pl.when(k == 0)
    def _():
        acc_ref[...] = jnp.zeros_like(acc_ref)

    # ffn[0]: Linear(D -> 4D) chunk + ReLU  (bf16 MXU matmul, f32 accumulation)
    x_bf = x_ref[...].astype(jnp.bfloat16)
    h = jnp.dot(x_bf, w1_ref[...], preferred_element_type=jnp.float32)
    h = jnp.maximum(h + b1_ref[...], 0.0)

    # ffn[2]: Linear(4D -> D), accumulated over H chunks into f32 VMEM scratch
    acc_ref[...] += jnp.dot(h.astype(jnp.bfloat16), w2_ref[...],
                            preferred_element_type=jnp.float32)

    @pl.when(k == pl.num_programs(1) - 1)
    def _():
        y = acc_ref[...] + b2_ref[...]
        # TODO(synk): dropout(p=0.1) is identity in eval mode; training-mode RNG masking not implemented.
        r = x_ref[...].astype(jnp.float32) + y  # residual: x + dropout(ffn(x))

        # LayerNorm over last dim D (biased variance, as PyTorch), in f32
        mean = jnp.mean(r, axis=-1, keepdims=True)
        var = jnp.mean((r - mean) ** 2, axis=-1, keepdims=True)
        norm = (r - mean) * jax.lax.rsqrt(var + LN_EPS)
        o_ref[...] = (norm * g_ref[...] + beta_ref[...]).astype(o_ref.dtype)


def ffn_forward(x, w1, b1, w2, b2, gamma, beta, *, tm=256, th=512):
    """x: (B, S, D) float32. Returns (B, S, D)."""
    B, S, D = x.shape
    H = w1.shape[1]
    N = B * S

    # Row tile: big enough to fill the MXU, clamped for small N, padded for tails.
    tm = min(tm, _round_up(N, 8))
    n_pad = _round_up(N, tm)

    # Hidden-dim tile: stream weight slices instead of keeping full W1/W2 resident.
    if H % th != 0:
        th = H
    num_h = H // th

    x2d = x.reshape(N, D).astype(jnp.float32)
    if n_pad != N:
        x2d = jnp.pad(x2d, ((0, n_pad - N), (0, 0)))

    # bf16 weights: halve VMEM residency / DMA traffic; f32 accumulation in-kernel.
    w1_bf = w1.astype(jnp.bfloat16)
    w2_bf = w2.astype(jnp.bfloat16)
    b1_2d = b1.reshape(1, H).astype(jnp.float32)
    b2_2d = b2.reshape(1, D).astype(jnp.float32)
    g_2d = gamma.reshape(1, D).astype(jnp.float32)
    beta_2d = beta.reshape(1, D).astype(jnp.float32)

    cost = pl.CostEstimate(
        flops=4 * n_pad * D * H,                      # two matmuls, 2 flops/MAC
        transcendentals=n_pad,                        # rsqrt per row
        bytes_accessed=(2 * n_pad * D * 4             # x in + out (f32)
                        + 2 * D * H * 2               # W1 + W2 (bf16)
                        + (H + 3 * D) * 4),           # biases + LN params
    )

    out = pl.pallas_call(
        ffn_kernel,
        out_shape=jax.ShapeDtypeStruct((n_pad, D), x.dtype),
        grid_spec=pltpu.PrefetchScalarGridSpec(
            num_scalar_prefetch=0,
            grid=(n_pad // tm, num_h),
            in_specs=[
                pl.BlockSpec((tm, D), lambda i, k: (i, 0)),    # x rows (VMEM-resident over k)
                pl.BlockSpec((D, th), lambda i, k: (0, k)),    # W1 H-chunk
                pl.BlockSpec((1, th), lambda i, k: (0, k)),    # b1 H-chunk
                pl.BlockSpec((th, D), lambda i, k: (k, 0)),    # W2 H-chunk
                pl.BlockSpec((1, D), lambda i, k: (0, 0)),     # b2
                pl.BlockSpec((1, D), lambda i, k: (0, 0)),     # gamma
                pl.BlockSpec((1, D), lambda i, k: (0, 0)),     # beta
            ],
            out_specs=pl.BlockSpec((tm, D), lambda i, k: (i, 0)),
            scratch_shapes=[pltpu.VMEM((tm, D), jnp.float32)],  # f32 accumulator
        ),
        compiler_params=pltpu.CompilerParams(
            dimension_semantics=("parallel", "arbitrary"),
            vmem_limit_bytes=64 * 1024 * 1024,
        ),
        cost_estimate=cost,
    )(x2d, w1_bf, b1_2d, w2_bf, b2_2d, g_2d, beta_2d)

    return out[:N].reshape(B, S, D)


def reference_ffn(x, w1, b1, w2, b2, gamma, beta):
    h = jnp.maximum(x @ w1 + b1, 0.0)
    y = h @ w2 + b2
    r = x + y
    mean = jnp.mean(r, axis=-1, keepdims=True)
    var = jnp.mean((r - mean) ** 2, axis=-1, keepdims=True)
    return (r - mean) / jnp.sqrt(var + LN_EPS) * gamma + beta


if __name__ == "__main__":
    B, S, D = 2, 8, 32
    H = 4 * D

    key = jax.random.PRNGKey(0)
    kx, k1, kb1, k2, kb2 = jax.random.split(key, 5)

    x = jax.random.normal(kx, (B, S, D), dtype=jnp.float32)

    # Deterministic parameter init (uniform like PyTorch Linear default scale).
    lim1 = 1.0 / (D ** 0.5)
    lim2 = 1.0 / (H ** 0.5)
    w1 = jax.random.uniform(k1, (D, H), minval=-lim1, maxval=lim1, dtype=jnp.float32)
    b1 = jax.random.uniform(kb1, (H,), minval=-lim1, maxval=lim1, dtype=jnp.float32)
    w2 = jax.random.uniform(k2, (H, D), minval=-lim2, maxval=lim2, dtype=jnp.float32)
    b2 = jax.random.uniform(kb2, (D,), minval=-lim2, maxval=lim2, dtype=jnp.float32)
    gamma = jnp.ones((D,), dtype=jnp.float32)
    beta = jnp.zeros((D,), dtype=jnp.float32)

    out = ffn_forward(x, w1, b1, w2, b2, gamma, beta)
    out = jax.block_until_ready(out)

    ref = reference_ffn(x, w1, b1, w2, b2, gamma, beta)
    assert out.shape == (B, S, D)
    # bf16 matmuls (f32 accumulation) -> validate with a correspondingly looser
    # tolerance against the pure-f32 reference; LayerNorm in f32 keeps error ~1e-2.
    assert jnp.allclose(out, ref, atol=3e-2, rtol=3e-2), "mismatch vs reference"

    print("KERNEL_OK")
</pallas_src>

<mosaic_0001>
module attributes {stable_mosaic.version = 11 : i64} {
  func.func @ffn_kernel(%arg0: i32, %arg1: i32, %arg2: memref<16x32xf32, #tpu.memory_space<vmem>>, %arg3: memref<32x128xbf16, #tpu.memory_space<vmem>>, %arg4: memref<1x128xf32, #tpu.memory_space<vmem>>, %arg5: memref<128x32xbf16, #tpu.memory_space<vmem>>, %arg6: memref<1x32xf32, #tpu.memory_space<vmem>>, %arg7: memref<1x32xf32, #tpu.memory_space<vmem>>, %arg8: memref<1x32xf32, #tpu.memory_space<vmem>>, %arg9: memref<16x32xf32, #tpu.memory_space<vmem>>, %arg10: memref<16x32xf32, #tpu.memory_space<vmem>>) attributes {dimension_semantics = [#tpu.dimension_semantics<parallel>, #tpu.dimension_semantics<arbitrary>], iteration_bounds = array<i64: 1, 1>, scalar_prefetch = 0 : i64, scratch_operands = 1 : i64, tpu.core_type = #tpu.core_type<tc>, window_params = [{transform_indices = @transform_0, window_bounds = array<i64: 16, 32>}, {transform_indices = @transform_1, window_bounds = array<i64: 32, 128>}, {transform_indices = @transform_2, window_bounds = array<i64: 1, 128>}, {transform_indices = @transform_3, window_bounds = array<i64: 128, 32>}, {pipeline_mode = #tpu.pipeline_mode<synchronous>, transform_indices = @transform_4, window_bounds = array<i64: 1, 32>}, {pipeline_mode = #tpu.pipeline_mode<synchronous>, transform_indices = @transform_5, window_bounds = array<i64: 1, 32>}, {pipeline_mode = #tpu.pipeline_mode<synchronous>, transform_indices = @transform_6, window_bounds = array<i64: 1, 32>}, {transform_indices = @transform_7, window_bounds = array<i64: 16, 32>}]} {
    %c0_i32 = arith.constant 0 : i32
    %0 = arith.cmpi eq, %arg1, %c0_i32 : i32
    %1 = arith.extui %0 : i1 to i32
    %c0_i32_0 = arith.constant 0 : i32
    %2 = arith.cmpi ne, %1, %c0_i32_0 : i32
    scf.if %2 {
      %cst_16 = arith.constant 0.000000e+00 : f32
      %21 = vector.broadcast %cst_16 : f32 to vector<16x32xf32>
      %c0_17 = arith.constant 0 : index
      %c0_18 = arith.constant 0 : index
      %22 = vector.load %arg10[%c0_17, %c0_18] : memref<16x32xf32, #tpu.memory_space<vmem>>, vector<16x32xf32>
      tpu.vector_store %arg10[%c0_17, %c0_18], %21 {strides = array<i32>} : memref<16x32xf32, #tpu.memory_space<vmem>>, vector<16x32xf32>,
    } else {
    }
    %c0 = arith.constant 0 : index
    %c0_1 = arith.constant 0 : index
    %3 = vector.load %arg2[%c0, %c0_1] : memref<16x32xf32, #tpu.memory_space<vmem>>, vector<16x32xf32>
    %4 = arith.truncf %3 : vector<16x32xf32> to vector<16x32xbf16>
    %c0_2 = arith.constant 0 : index
    %c0_3 = arith.constant 0 : index
    %5 = vector.load %arg3[%c0_2, %c0_3] : memref<32x128xbf16, #tpu.memory_space<vmem>>, vector<32x128xbf16>
    %cst = arith.constant dense<0.000000e+00> : vector<16x128xf32>
    %6 = tpu.matmul %4, %5, %cst {dimension_numbers = #tpu.dot_dimension_numbers<[1], [0], [0], [1], [0, 0, 1, 1], [], []>} : vector<16x32xbf16>, vector<32x128xbf16>, vector<16x128xf32> -> vector<16x128xf32>
    %c0_4 = arith.constant 0 : index
    %c0_5 = arith.constant 0 : index
    %7 = vector.load %arg4[%c0_4, %c0_5] : memref<1x128xf32, #tpu.memory_space<vmem>>, vector<1x128xf32>
    %8 = vector.broadcast %7 : vector<1x128xf32> to vector<16x128xf32>
    %9 = arith.addf %6, %8 : vector<16x128xf32>
    %cst_6 = arith.constant 0.000000e+00 : f32
    %10 = vector.broadcast %cst_6 : f32 to vector<16x128xf32>
    %11 = arith.maximumf %9, %10 : vector<16x128xf32>
    %c0_7 = arith.constant 0 : index
    %c0_8 = arith.constant 0 : index
    %12 = vector.load %arg10[%c0_7, %c0_8] : memref<16x32xf32, #tpu.memory_space<vmem>>, vector<16x32xf32>
    %13 = arith.truncf %11 : vector<16x128xf32> to vector<16x128xbf16>
    %c0_9 = arith.constant 0 : index
    %c0_10 = arith.constant 0 : index
    %14 = vector.load %arg5[%c0_9, %c0_10] : memref<128x32xbf16, #tpu.memory_space<vmem>>, vector<128x32xbf16>
    %cst_11 = arith.constant dense<0.000000e+00> : vector<16x32xf32>
    %15 = tpu.matmul %13, %14, %cst_11 {dimension_numbers = #tpu.dot_dimension_numbers<[1], [0], [0], [1], [0, 0, 1, 1], [], []>} : vector<16x128xbf16>, vector<128x32xbf16>, vector<16x32xf32> -> vector<16x32xf32>
    %16 = arith.addf %12, %15 : vector<16x32xf32>
    %c0_12 = arith.constant 0 : index
    %c0_13 = arith.constant 0 : index
    %17 = vector.load %arg10[%c0_12, %c0_13] : memref<16x32xf32, #tpu.memory_space<vmem>>, vector<16x32xf32>
    tpu.vector_store %arg10[%c0_12, %c0_13], %16 {strides = array<i32>} : memref<16x32xf32, #tpu.memory_space<vmem>>, vector<16x32xf32>,
    %c0_i32_14 = arith.constant 0 : i32
    %18 = arith.cmpi eq, %arg1, %c0_i32_14 : i32
    %19 = arith.extui %18 : i1 to i32
    %c0_i32_15 = arith.constant 0 : i32
    %20 = arith.cmpi ne, %19, %c0_i32_15 : i32
    scf.if %20 {
      %c0_16 = arith.constant 0 : index
      %c0_17 = arith.constant 0 : index
      %21 = vector.load %arg10[%c0_16, %c0_17] : memref<16x32xf32, #tpu.memory_space<vmem>>, vector<16x32xf32>
      %c0_18 = arith.constant 0 : index
      %c0_19 = arith.constant 0 : index
      %22 = vector.load %arg6[%c0_18, %c0_19] : memref<1x32xf32, #tpu.memory_space<vmem>>, vector<1x32xf32>
      %23 = vector.broadcast %22 : vector<1x32xf32> to vector<16x32xf32>
      %24 = arith.addf %21, %23 : vector<16x32xf32>
      %c0_20 = arith.constant 0 : index
      %c0_21 = arith.constant 0 : index
      %25 = vector.load %arg2[%c0_20, %c0_21] : memref<16x32xf32, #tpu.memory_space<vmem>>, vector<16x32xf32>
      %26 = arith.addf %25, %24 : vector<16x32xf32>
      %cst_22 = arith.constant dense<0.000000e+00> : vector<16xf32>
      %27 = vector.multi_reduction <add>, %26, %cst_22 [1] : vector<16x32xf32> to vector<16xf32>
      %28 = vector.shape_cast %27 : vector<16xf32> to vector<16x1xf32>
      %cst_23 = arith.constant 3.200000e+01 : f32
      %29 = vector.broadcast %cst_23 : f32 to vector<16x1xf32>
      %30 = arith.divf %28, %29 : vector<16x1xf32>
      %31 = vector.broadcast %30 : vector<16x1xf32> to vector<16x32xf32>
      %32 = arith.subf %26, %31 : vector<16x32xf32>
      %33 = arith.mulf %32, %32 : vector<16x32xf32>
      %cst_24 = arith.constant dense<0.000000e+00> : vector<16xf32>
      %34 = vector.multi_reduction <add>, %33, %cst_24 [1] : vector<16x32xf32> to vector<16xf32>
      %35 = vector.shape_cast %34 : vector<16xf32> to vector<16x1xf32>
      %cst_25 = arith.constant 3.200000e+01 : f32
      %36 = vector.broadcast %cst_25 : f32 to vector<16x1xf32>
      %37 = arith.divf %35, %36 : vector<16x1xf32>
      %38 = vector.broadcast %30 : vector<16x1xf32> to vector<16x32xf32>
      %39 = arith.subf %26, %38 : vector<16x32xf32>
      %cst_26 = arith.constant 9.99999974E-6 : f32
      %40 = vector.broadcast %cst_26 : f32 to vector<16x1xf32>
      %41 = arith.addf %37, %40 : vector<16x1xf32>
      %42 = math.rsqrt %41 : vector<16x1xf32>
      %43 = vector.broadcast %42 : vector<16x1xf32> to vector<16x32xf32>
      %44 = arith.mulf %39, %43 : vector<16x32xf32>
      %c0_27 = arith.constant 0 : index
      %c0_28 = arith.constant 0 : index
      %45 = vector.load %arg7[%c0_27, %c0_28] : memref<1x32xf32, #tpu.memory_space<vmem>>, vector<1x32xf32>
      %46 = vector.broadcast %45 : vector<1x32xf32> to vector<16x32xf32>
      %47 = arith.mulf %44, %46 : vector<16x32xf32>
      %c0_29 = arith.constant 0 : index
      %c0_30 = arith.constant 0 : index
      %48 = vector.load %arg8[%c0_29, %c0_30] : memref<1x32xf32, #tpu.memory_space<vmem>>, vector<1x32xf32>
      %49 = vector.broadcast %48 : vector<1x32xf32> to vector<16x32xf32>
      %50 = arith.addf %47, %49 : vector<16x32xf32>
      %c0_31 = arith.constant 0 : index
      %c0_32 = arith.constant 0 : index
      %51 = vector.load %arg9[%c0_31, %c0_32] : memref<16x32xf32, #tpu.memory_space<vmem>>, vector<16x32xf32>
      tpu.vector_store %arg9[%c0_31, %c0_32], %50 {strides = array<i32>} : memref<16x32xf32, #tpu.memory_space<vmem>>, vector<16x32xf32>,
    } else {
    }
    return
  }
  func.func @transform_0(%arg0: i32, %arg1: i32) -> (i32, i32) {
    %c0_i32 = arith.constant 0 : i32
    %c0_i32_0 = arith.constant 0 : i32
    return %arg0, %c0_i32 : i32, i32
  }
  func.func @transform_1(%arg0: i32, %arg1: i32) -> (i32, i32) {
    %c0_i32 = arith.constant 0 : i32
    %c0_i32_0 = arith.constant 0 : i32
    return %c0_i32, %arg1 : i32, i32
  }
  func.func @transform_2(%arg0: i32, %arg1: i32) -> (i32, i32) {
    %c0_i32 = arith.constant 0 : i32
    %c0_i32_0 = arith.constant 0 : i32
    return %c0_i32, %arg1 : i32, i32
  }
  func.func @transform_3(%arg0: i32, %arg1: i32) -> (i32, i32) {
    %c0_i32 = arith.constant 0 : i32
    %c0_i32_0 = arith.constant 0 : i32
    return %arg1, %c0_i32 : i32, i32
  }
  func.func @transform_4(%arg0: i32, %arg1: i32) -> (i32, i32) {
    %c0_i32 = arith.constant 0 : i32
    %c0_i32_0 = arith.constant 0 : i32
    %c0_i32_1 = arith.constant 0 : i32
    return %c0_i32, %c0_i32_0 : i32, i32
  }
  func.func @transform_5(%arg0: i32, %arg1: i32) -> (i32, i32) {
    %c0_i32 = arith.constant 0 : i32
    %c0_i32_0 = arith.constant 0 : i32
    %c0_i32_1 = arith.constant 0 : i32
    return %c0_i32, %c0_i32_0 : i32, i32
  }
  func.func @transform_6(%arg0: i32, %arg1: i32) -> (i32, i32) {
    %c0_i32 = arith.constant 0 : i32
    %c0_i32_0 = arith.constant 0 : i32
    %c0_i32_1 = arith.constant 0 : i32
    return %c0_i32, %c0_i32_0 : i32, i32
  }
  func.func @transform_7(%arg0: i32, %arg1: i32) -> (i32, i32) {
    %c0_i32 = arith.constant 0 : i32
    %c0_i32_0 = arith.constant 0 : i32
    return %arg0, %c0_i32 : i32, i32
  }
}

</mosaic_0001>

<llo_original>
// kernel: tpu_custom_call.1
$region0: #{tpu_custom_call.1}
  #allocation0 [shape = 'u32[]', space=smem, size = 0x4, offset = 0x4, fixed_abs, tag = 'smem constant byte address 0x4 - core index']
  #allocation1 [shape = 'u32[144,128]{1,0:T(1,128)}', space=vmem, size = 0x12000, scoped, tag = 'internal scratch']
  #allocation2 [shape = 'f32[16,32]{1,0:T(8,128)}', space=vmem, size = 0x2000, scoped, tag = 'scratch operand']
  %s0 = inlined_call_operand.hbm [shape: f32[16,32], index: 0, kind: input, shape index: {}]
  %s1 = inlined_call_operand.hbm [shape: bf16[32,128], index: 1, kind: input, shape index: {}]
  %s2 = inlined_call_operand.hbm [shape: f32[1,128], index: 2, kind: input, shape index: {}]
  %s3 = inlined_call_operand.hbm [shape: bf16[128,32], index: 3, kind: input, shape index: {}]
  %s4 = inlined_call_operand.hbm [shape: f32[1,32], index: 4, kind: input, shape index: {}]
  %s5 = inlined_call_operand.hbm [shape: f32[1,32], index: 5, kind: input, shape index: {}]
  %s6 = inlined_call_operand.hbm [shape: f32[1,32], index: 6, kind: input, shape index: {}]
  %s7 = inlined_call_operand.hbm [shape: f32[16,32], index: 7, kind: output, shape index: {}]
  %s8 = sld [smem:[#allocation0]]
  $region74: #{tpu_custom_call.1} parent=0
    _
  %s10 = ssub.s32 1, %s8
  %s11 = scalar_select 0, %s10, %s8
  $region1: #{tpu_custom_call.1} parent=0
    #allocation3 [shape = 'u8[8192]{0}', space=vmem, size = 0x2000, scoped, tag = 'input window, operand 0, single buffered']
    #allocation4 [shape = 's32[1]{0}', space=sflag, size = 0x4, scoped, tag = 'scoped memory for tpu_custom_call.1']
    #allocation5 [shape = 's32[1]{0}', space=sflag, size = 0x4, scoped, tag = 'scoped memory for tpu_custom_call.1']
    #allocation6 [shape = 'u8[8192]{0}', space=vmem, size = 0x2000, scoped, tag = 'input window, operand 1, single buffered']
    #allocation7 [shape = 's32[1]{0}', space=sflag, size = 0x4, scoped, tag = 'scoped memory for tpu_custom_call.1']
    #allocation8 [shape = 'u8[512]{0}', space=vmem, size = 0x400, scoped, tag = 'input window, operand 2, single buffered']
    #allocation9 [shape = 'u8[32768]{0}', space=vmem, size = 0x8000, scoped, tag = 'input window, operand 3, single buffered']
    #allocation10 [shape = 's32[1]{0}', space=sflag, size = 0x4, scoped, tag = 'scoped memory for tpu_custom_call.1']
    #allocation11 [shape = 'u8[512]{0}', space=vmem, size = 0x400, scoped, tag = 'input window, operand 4, single buffered']
    #allocation12 [shape = 'u8[512]{0}', space=vmem, size = 0x400, scoped, tag = 'input window, operand 5, single buffered']
    #allocation13 [shape = 's32[1]{0}', space=sflag, size = 0x4, scoped, tag = 'scoped memory for tpu_custom_call.1']
    #allocation14 [shape = 'u8[512]{0}', space=vmem, size = 0x400, scoped, tag = 'input window, operand 6, single buffered']
    #allocation15 [shape = 'u8[8192]{0}', space=vmem, size = 0x2000, scoped, tag = 'output window, operand 0, single buffered']
    %12 = vsyncpa [#allocation4], 0
    %13 = vsyncpa [#allocation7], 0
    %14 = vsyncpa [#allocation10], 0
    %15 = vsyncpa [#allocation13], 0
    %16 = vsyncpa [#allocation5], 0
    // Predicated region
    $region2: #{tpu_custom_call.1} parent=1 // pred_check
      _
    $region3: #{tpu_custom_call.1} parent=1 // pred_check_branch
      %18 = sbr.rel (0) target = $region5
    $region4: #{tpu_custom_call.1} parent=1 // pred_region
      %s20 = ssub.s32 256, 256
      %21 = vsyncadd [#allocation4], %s20
      %s22 = sshll.u32 [#allocation3], 4
      %s23 = int_to_ptr.vmem [resolvable:$true] %s22
      %28 = dma.hbm_to_vmem [thread:$0]  %s0, 256, %s23, [#allocation4], 128, 128, 8
    $region5: #{tpu_custom_call.1} parent=1 // pred_fallthru
      _
    // Predicated region
    $region6: #{tpu_custom_call.1} parent=1 // pred_check
      _
    $region7: #{tpu_custom_call.1} parent=1 // pred_check_branch
      %30 = sbr.rel (0) target = $region9
    $region8: #{tpu_custom_call.1} parent=1 // pred_region
      %s32 = ssub.s32 256, 256
      %33 = vsyncadd [#allocation7], %s32
      %s34 = sshll.u32 [#allocation6], 4
      %s35 = int_to_ptr.vmem [resolvable:$true] %s34
      %40 = dma.hbm_to_vmem [thread:$0]  %s1, 256, %s35, [#allocation7], 64, 64, 4
    $region9: #{tpu_custom_call.1} parent=1 // pred_fallthru
      _
    // Predicated region
    $region10: #{tpu_custom_call.1} parent=1 // pred_check
      _
    $region11: #{tpu_custom_call.1} parent=1 // pred_check_branch
      %42 = sbr.rel (0) target = $region13
    $region12: #{tpu_custom_call.1} parent=1 // pred_region
      %s44 = ssub.s32 16, 16
      %45 = vsyncadd [#allocation7], %s44
      %s47 = sshll.u32 [#allocation8], 4
      %s48 = int_to_ptr.vmem [resolvable:$true] %s47
      %50 = dma.hbm_to_vmem [thread:$0]  %s2, 16, %s48, [#allocation7]
    $region13: #{tpu_custom_call.1} parent=1 // pred_fallthru
      _
    // Predicated region
    $region14: #{tpu_custom_call.1} parent=1 // pred_check
      _
    $region15: #{tpu_custom_call.1} parent=1 // pred_check_branch
      %52 = sbr.rel (0) target = $region17
    $region16: #{tpu_custom_call.1} parent=1 // pred_region
      %s54 = ssub.s32 1024, 1024
      %55 = vsyncadd [#allocation10], %s54
      %s56 = sshll.u32 [#allocation9], 4
      %s57 = int_to_ptr.vmem [resolvable:$true] %s56
      %62 = dma.hbm_to_vmem [thread:$0]  %s3, 1024, %s57, [#allocation10], 64, 64, 4
    $region17: #{tpu_custom_call.1} parent=1 // pred_fallthru
      _
    // Predicated region
    $region18: #{tpu_custom_call.1} parent=1 // pred_check
      _
    $region19: #{tpu_custom_call.1} parent=1 // pred_check_branch
      %64 = sbr.rel (0) target = $region21
    $region20: #{tpu_custom_call.1} parent=1 // pred_region
      %s66 = ssub.s32 16, 16
      %67 = vsyncadd [#allocation10], %s66
      %s69 = sshll.u32 [#allocation11], 4
      %s70 = int_to_ptr.vmem [resolvable:$true] %s69
      %72 = dma.hbm_to_vmem [thread:$0]  %s4, 16, %s70, [#allocation10]
    $region21: #{tpu_custom_call.1} parent=1 // pred_fallthru
      _
    // Predicated region
    $region22: #{tpu_custom_call.1} parent=1 // pred_check
      _
    $region23: #{tpu_custom_call.1} parent=1 // pred_check_branch
      %74 = sbr.rel (0) target = $region25
    $region24: #{tpu_custom_call.1} parent=1 // pred_region
      %s76 = ssub.s32 16, 16
      %77 = vsyncadd [#allocation13], %s76
      %s79 = sshll.u32 [#allocation12], 4
      %s80 = int_to_ptr.vmem [resolvable:$true] %s79
      %82 = dma.hbm_to_vmem [thread:$0]  %s5, 16, %s80, [#allocation13]
    $region25: #{tpu_custom_call.1} parent=1 // pred_fallthru
      _
    // Predicated region
    $region26: #{tpu_custom_call.1} parent=1 // pred_check
      _
    $region27: #{tpu_custom_call.1} parent=1 // pred_check_branch
      %84 = sbr.rel (0) target = $region29
    $region28: #{tpu_custom_call.1} parent=1 // pred_region
      %s86 = ssub.s32 16, 16
      %87 = vsyncadd [#allocation13], %s86
      %s89 = sshll.u32 [#allocation14], 4
      %s90 = int_to_ptr.vmem [resolvable:$true] %s89
      %92 = dma.hbm_to_vmem [thread:$0]  %s6, 16, %s90, [#allocation13]
    $region29: #{tpu_custom_call.1} parent=1 // pred_fallthru
      _
    // Predicated region
    $region30: #{tpu_custom_call.1} parent=1 // pred_check
      _
    $region31: #{tpu_custom_call.1} parent=1 // pred_check_branch
      %94 = sbr.rel (0) target = $region33
    $region32: #{tpu_custom_call.1} parent=1 // pred_region
      %95 = dma.done [#allocation4], 256
    $region33: #{tpu_custom_call.1} parent=1 // pred_fallthru
      _
    // Predicated region
    $region34: #{tpu_custom_call.1} parent=1 // pred_check
      _
    $region35: #{tpu_custom_call.1} parent=1 // pred_check_branch
      %97 = sbr.rel (0) target = $region37
    $region36: #{tpu_custom_call.1} parent=1 // pred_region
      %98 = dma.done [#allocation7], 256
    $region37: #{tpu_custom_call.1} parent=1 // pred_fallthru
      _
    // Predicated region
    $region38: #{tpu_custom_call.1} parent=1 // pred_check
      _
    $region39: #{tpu_custom_call.1} parent=1 // pred_check_branch
      %100 = sbr.rel (0) target = $region41
    $region40: #{tpu_custom_call.1} parent=1 // pred_region
      %101 = dma.done [#allocation7], 16
    $region41: #{tpu_custom_call.1} parent=1 // pred_fallthru
      _
    // Predicated region
    $region42: #{tpu_custom_call.1} parent=1 // pred_check
      _
    $region43: #{tpu_custom_call.1} parent=1 // pred_check_branch
      %103 = sbr.rel (0) target = $region45
    $region44: #{tpu_custom_call.1} parent=1 // pred_region
      %104 = dma.done [#allocation10], 1024
    $region45: #{tpu_custom_call.1} parent=1 // pred_fallthru
      _
    // Predicated region
    $region46: #{tpu_custom_call.1} parent=1 // pred_check
      _
    $region47: #{tpu_custom_call.1} parent=1 // pred_check_branch
      %106 = sbr.rel (0) target = $region49
    $region48: #{tpu_custom_call.1} parent=1 // pred_region
      %107 = dma.done [#allocation10], 16
    $region49: #{tpu_custom_call.1} parent=1 // pred_fallthru
      _
    // Predicated region
    $region50: #{tpu_custom_call.1} parent=1 // pred_check
      _
    $region51: #{tpu_custom_call.1} parent=1 // pred_check_branch
      %109 = sbr.rel (0) target = $region53
    $region52: #{tpu_custom_call.1} parent=1 // pred_region
      %110 = dma.done [#allocation13], 16
    $region53: #{tpu_custom_call.1} parent=1 // pred_fallthru
      _
    // Predicated region
    $region54: #{tpu_custom_call.1} parent=1 // pred_check
      _
    $region55: #{tpu_custom_call.1} parent=1 // pred_check_branch
      %112 = sbr.rel (0) target = $region57
    $region56: #{tpu_custom_call.1} parent=1 // pred_region
      %113 = dma.done [#allocation13], 16
    $region57: #{tpu_custom_call.1} parent=1 // pred_fallthru
      _
    %p115 = scmp.eq.s32.totalorder 0, 0
    // Predicated region
    $region58: #{tpu_custom_call.1} parent=1 // pred_check
      %p116 = pneg %p115
    $region59: #{tpu_custom_call.1} parent=1 // pred_check_branch
      %118 = sbr.rel (%p116) target = $region61
    $region60: #{tpu_custom_call.1} parent=1 // pred_region
      %vm119 = vcmask 261120
      %120 = vst.msk [vmem:[#allocation2] sm:$0xff] %vm119, 0.0
      %121 = vst.msk [vmem:[#allocation2 + $0x8] sm:$0xff] %vm119, 0.0
    $region61: #{tpu_custom_call.1} parent=1 // pred_fallthru
      _
    %v122 = vld [vmem:[#allocation3] sm:$0xff]
    %v123 = vld [vmem:[#allocation3 + $0x8] sm:$0xff]
    %v124 = vpack.c.bf16 %v123, %v122
    %v125 = vld [vmem:[#allocation6] sm:$0xf]
    %v126 = vld [vmem:[#allocation6 + $0x4] sm:$0xf]
    %v127 = vld [vmem:[#allocation6 + $0x8] sm:$0xf]
    %v128 = vld [vmem:[#allocation6 + $0xc] sm:$0xf]
    %v129 = vld [vmem:[#allocation8] sm:$0x1]
    %v131 = vlaneseq
    %v132 = vshrl.u32 %v131, 7
    %v133 = vsub.s32 0, %v132
    %v134 = vrot.slane %v129, %v133
    %v140 = vunpack.c.l.b16 %v125
    %v141 = vunpack.c.l.b16 %v126
    %v142 = vunpack.c.l.b16 %v127
    %v143 = vunpack.c.l.b16 %v128
    %v144 = vpack.c.b16 %v141, %v140
    %v145 = vpack.c.b16 %v143, %v142
    %vm148 = vcmask 261120
    %v150 = vsel %vm148, %v124, 0
    %152 = vmatprep.subr.bf16.mxu0 0
    %153 = vmatpush1.bf16.msra.mxu0 %v144
    %154 = vmatprep.subr.bf16.mxu0 0
    %155 = vmatpush1.bf16.msra.mxu0 %v145
    %156 = vmatprep.subr.bf16.mxu0 0
    %157 = vmatpush1.bf16.msra.mxu0 0
    %158 = vmatprep.subr.bf16.mxu0 0
    %159 = vmatpush1.bf16.msra.mxu0 0
    %160 = vmatprep.subr.bf16.mxu0 0
    %161 = vmatpush1.bf16.msra.mxu0 0
    %162 = vmatprep.subr.bf16.mxu0 0
    %163 = vmatpush1.bf16.msra.mxu0 0
    %164 = vmatprep.subr.bf16.mxu0 0
    %165 = vmatpush1.bf16.msra.mxu0 0
    %166 = vmatprep.subr.bf16.mxu0 0
    %167 = vmatpush1.bf16.msra.mxu0 0
    %168 = vmatprep.subr.bf16.mxu0 0
    %169 = vmatpush1.bf16.msra.mxu0 0
    %170 = vmatprep.subr.bf16.mxu0 0
    %171 = vmatpush1.bf16.msra.mxu0 0
    %172 = vmatprep.subr.bf16.mxu0 0
    %173 = vmatpush1.bf16.msra.mxu0 0
    %174 = vmatprep.subr.bf16.mxu0 0
    %175 = vmatpush1.bf16.msra.mxu0 0
    %176 = vmatprep.subr.bf16.mxu0 0
    %177 = vmatpush1.bf16.msra.mxu0 0
    %178 = vmatprep.subr.bf16.mxu0 0
    %179 = vmatpush1.bf16.msra.mxu0 0
    %180 = vmatprep.subr.bf16.mxu0 0
    %181 = vmatpush1.bf16.msra.mxu0 0
    %182 = vmatprep.subr.bf16.mxu0 0
    %183 = vmatpush1.bf16.msra.mxu0 0
    %184 = vmatprep.mubr.bf16.mxu0 0
    %185 = vmatmul.mubr.bf16.gmra.mrb[0].mxu0 %v150
    %v186 = vpop.f32.mrb[0].mxu0
    %v187 = vadd.f32 %v134, %v186
    %v188 = vpop.f32.mrb[0].mxu0
    %v189 = vpop.f32.mrb[0].mxu0
    %v190 = vadd.f32 %v134, %v189
    %v191 = vpop.f32.mrb[0].mxu0
    %192 = vdwg.mxu0
    %v193 = vmax.f32 %v187, 0.0
    %v194 = vmax.f32 %v190, 0.0
    %v195 = vld [vmem:[#allocation2] sm:$0xff]
    %v196 = vld [vmem:[#allocation2 + $0x8] sm:$0xff]
    %v197 = vpack.c.bf16 %v194, %v193
    %v198 = vld [vmem:[#allocation9] sm:$0xf]
    %v199 = vld [vmem:[#allocation9 + $0x4] sm:$0xf]
    %v200 = vld [vmem:[#allocation9 + $0x8] sm:$0xf]
    %v201 = vld [vmem:[#allocation9 + $0xc] sm:$0xf]
    %v202 = vld [vmem:[#allocation9 + $0x10] sm:$0xf]
    %v203 = vld [vmem:[#allocation9 + $0x14] sm:$0xf]
    %v204 = vld [vmem:[#allocation9 + $0x18] sm:$0xf]
    %v205 = vld [vmem:[#allocation9 + $0x1c] sm:$0xf]
    %v206 = vld [vmem:[#allocation9 + $0x20] sm:$0xf]
    %v207 = vld [vmem:[#allocation9 + $0x24] sm:$0xf]
    %v208 = vld [vmem:[#allocation9 + $0x28] sm:$0xf]
    %v209 = vld [vmem:[#allocation9 + $0x2c] sm:$0xf]
    %v210 = vld [vmem:[#allocation9 + $0x30] sm:$0xf]
    %v211 = vld [vmem:[#allocation9 + $0x34] sm:$0xf]
    %v212 = vld [vmem:[#allocation9 + $0x38] sm:$0xf]
    %v213 = vld [vmem:[#allocation9 + $0x3c] sm:$0xf]
    %v230 = vunpack.c.l.b16 %v198
    %v231 = vunpack.c.l.b16 %v199
    %v232 = vunpack.c.l.b16 %v200
    %v233 = vunpack.c.l.b16 %v201
    %v234 = vunpack.c.l.b16 %v202
    %v235 = vunpack.c.l.b16 %v203
    %v236 = vunpack.c.l.b16 %v204
    %v237 = vunpack.c.l.b16 %v205
    %v238 = vunpack.c.l.b16 %v206
    %v239 = vunpack.c.l.b16 %v207
    %v240 = vunpack.c.l.b16 %v208
    %v241 = vunpack.c.l.b16 %v209
    %v242 = vunpack.c.l.b16 %v210
    %v243 = vunpack.c.l.b16 %v211
    %v244 = vunpack.c.l.b16 %v212
    %v245 = vunpack.c.l.b16 %v213
    %v246 = vpack.c.b16 %v231, %v230
    %v247 = vpack.c.b16 %v233, %v232
    %v248 = vpack.c.b16 %v235, %v234
    %v249 = vpack.c.b16 %v237, %v236
    %v250 = vpack.c.b16 %v239, %v238
    %v251 = vpack.c.b16 %v241, %v240
    %v252 = vpack.c.b16 %v243, %v242
    %v253 = vpack.c.b16 %v245, %v244
    %262 = vmatprep.subr.bf16.mxu0 0
    %263 = vmatpush1.bf16.msra.mxu0 %v246
    %264 = vmatprep.subr.bf16.mxu0 0
    %265 = vmatpush1.bf16.msra.mxu0 %v247
    %266 = vmatprep.subr.bf16.mxu0 0
    %267 = vmatpush1.bf16.msra.mxu0 %v248
    %268 = vmatprep.subr.bf16.mxu0 0
    %269 = vmatpush1.bf16.msra.mxu0 %v249
    %270 = vmatprep.subr.bf16.mxu0 0
    %271 = vmatpush1.bf16.msra.mxu0 %v250
    %272 = vmatprep.subr.bf16.mxu0 0
    %273 = vmatpush1.bf16.msra.mxu0 %v251
    %274 = vmatprep.subr.bf16.mxu0 0
    %275 = vmatpush1.bf16.msra.mxu0 %v252
    %276 = vmatprep.subr.bf16.mxu0 0
    %277 = vmatpush1.bf16.msra.mxu0 %v253
    %278 = vmatprep.subr.bf16.mxu0 0
    %279 = vmatpush1.bf16.msra.mxu0 0
    %280 = vmatprep.subr.bf16.mxu0 0
    %281 = vmatpush1.bf16.msra.mxu0 0
    %282 = vmatprep.subr.bf16.mxu0 0
    %283 = vmatpush1.bf16.msra.mxu0 0
    %284 = vmatprep.subr.bf16.mxu0 0
    %285 = vmatpush1.bf16.msra.mxu0 0
    %286 = vmatprep.subr.bf16.mxu0 0
    %287 = vmatpush1.bf16.msra.mxu0 0
    %288 = vmatprep.subr.bf16.mxu0 0
    %289 = vmatpush1.bf16.msra.mxu0 0
    %290 = vmatprep.subr.bf16.mxu0 0
    %291 = vmatpush1.bf16.msra.mxu0 0
    %292 = vmatprep.subr.bf16.mxu0 0
    %293 = vmatpush1.bf16.msra.mxu0 0
    %294 = vmatprep.mubr.bf16.mxu0 0
    %295 = vmatmul.mubr.bf16.gmra.mrb[0].mxu0 %v197
    %v296 = vpop.f32.mrb[0].mxu0
    %v297 = vadd.f32 0.0, %v296
    %v298 = vpop.f32.mrb[0].mxu0
    %v299 = vpop.f32.mrb[0].mxu0
    %v300 = vadd.f32 0.0, %v299
    %v301 = vpop.f32.mrb[0].mxu0
    %302 = vdwg.mxu0
    %v303 = vadd.f32 %v195, %v297
    %v304 = vadd.f32 %v196, %v300
    %305 = vst.msk [vmem:[#allocation2] sm:$0xff] %vm148, %v303
    %306 = vst.msk [vmem:[#allocation2 + $0x8] sm:$0xff] %vm148, %v304
    // Predicated region
    $region62: #{tpu_custom_call.1} parent=1 // pred_check
      %p307 = pneg %p115
    $region63: #{tpu_custom_call.1} parent=1 // pred_check_branch
      %309 = sbr.rel (%p307) target = $region65
    $region64: #{tpu_custom_call.1} parent=1 // pred_region
      %v310 = vld [vmem:[#allocation2] sm:$0xff]
      %v311 = vld [vmem:[#allocation2 + $0x8] sm:$0xff]
      %v312 = vld [vmem:[#allocation11] sm:$0x1]
      %v314 = vlaneseq
      %v315 = vshrl.u32 %v314, 7
      %v316 = vsub.s32 0, %v315
      %v317 = vrot.slane %v312, %v316
      %v319 = vadd.f32 %v310, %v317
      %v320 = vadd.f32 %v311, %v317
      %v321 = vld [vmem:[#allocation3] sm:$0xff]
      %v322 = vld [vmem:[#allocation3 + $0x8] sm:$0xff]
      %v323 = vadd.f32 %v321, %v319
      %v324 = vadd.f32 %v322, %v320
      %v325 = vsel %vm148, %v323, 0.0
      %326 = vadd.xlane.f32.xlu0 %v325
      %v327 = vpop.xlane.xlu0 %326
      %v328 = vsel %vm148, %v324, 0.0
      %329 = vadd.xlane.f32.xlu0 %v328
      %v330 = vpop.xlane.xlu0 %329
      %v331 = vrcp.pop 32.0
      %v332 = vmul.f32 %v327, %v331
      %v333 = vmul.f32 %v330, %v331
      %v334 = vsub.f32 %v323, %v332
      %v335 = vsub.f32 %v324, %v333
      %v336 = vmul.f32 %v334, %v334
      %v337 = vmul.f32 %v335, %v335
      %v338 = vsel %vm148, %v336, 0.0
      %339 = vadd.xlane.f32.xlu0 %v338
      %v340 = vpop.xlane.xlu0 %339
      %v341 = vsel %vm148, %v337, 0.0
      %342 = vadd.xlane.f32.xlu0 %v341
      %v343 = vpop.xlane.xlu0 %342
      %v344 = vmul.f32 %v340, %v331
      %v345 = vmul.f32 %v343, %v331
      %v346 = vadd.f32 %v344, 1e-05
      %v347 = vadd.f32 %v345, 1e-05
      %v348 = vrsqrt.pop %v346
      %v349 = vrsqrt.pop %v347
      %v350 = vmul.f32 %v334, %v348
      %v351 = vmul.f32 %v335, %v349
      %v352 = vld [vmem:[#allocation12] sm:$0x1]
      %v354 = vlaneseq
      %v355 = vshrl.u32 %v354, 7
      %v356 = vsub.s32 0, %v355
      %v357 = vrot.slane %v352, %v356
      %v359 = vmul.f32 %v350, %v357
      %v360 = vmul.f32 %v351, %v357
      %v361 = vld [vmem:[#allocation14] sm:$0x1]
      %v363 = vlaneseq
      %v364 = vshrl.u32 %v363, 7
      %v365 = vsub.s32 0, %v364
      %v366 = vrot.slane %v361, %v365
      %v368 = vadd.f32 %v359, %v366
      %v369 = vadd.f32 %v360, %v366
      %370 = vst.msk [vmem:[#allocation15] sm:$0xff] %vm148, %v368
      %371 = vst.msk [vmem:[#allocation15 + $0x8] sm:$0xff] %vm148, %v369
    $region65: #{tpu_custom_call.1} parent=1 // pred_fallthru
      _
    // Predicated region
    $region66: #{tpu_custom_call.1} parent=1 // pred_check
      _
    $region67: #{tpu_custom_call.1} parent=1 // pred_check_branch
      %373 = sbr.rel (0) target = $region69
    $region68: #{tpu_custom_call.1} parent=1 // pred_region
      %s375 = ssub.s32 256, 256
      %376 = vsyncadd [#allocation5], %s375
      %s377 = sshll.u32 [#allocation15], 4
      %s378 = int_to_ptr.vmem [resolvable:$true] %s377
      %383 = dma.vmem_to_hbm [thread:$0]  %s378, 256, %s7, [#allocation5], 128, 128, 8
    $region69: #{tpu_custom_call.1} parent=1 // pred_fallthru
      _
    // Predicated region
    $region70: #{tpu_custom_call.1} parent=1 // pred_check
      _
    $region71: #{tpu_custom_call.1} parent=1 // pred_check_branch
      %385 = sbr.rel (0) target = $region73
    $region72: #{tpu_custom_call.1} parent=1 // pred_region
      %386 = dma.done [#allocation5], 256
    $region73: #{tpu_custom_call.1} parent=1 // pred_fallthru
      _
    %387 = vsyncpa [#allocation4], 1
    %388 = vsyncpa [#allocation7], 1
    %389 = vsyncpa [#allocation10], 1
    %390 = vsyncpa [#allocation13], 1
    %391 = vsyncpa [#allocation5], 1

</llo_original>
